<compile_context>
chip_gen: v7x
topology: tpu7x:2x2x1
jax: 0.10.0
libtpu: 0.0.40
codegen_flags: <defaults>
</compile_context>

<pallas_src>
import functools
import math

import jax
import jax.numpy as jnp
from jax.experimental import pallas as pl
from jax.experimental.pallas import tpu as pltpu

TM_MAX = 256                      # M tile cap
VMEM_LIMIT = 48 * 1024 * 1024     # well under v7x 64 MiB physical VMEM


def _round_up(x, m):
    return (x + m - 1) // m * m


def _pick_tm(M):
    """Largest tile in {256,128,64,32,16} dividing M (avoids pad copies);
    otherwise round M up to a multiple of 16 (bf16 sublane packing)."""
    for t in (TM_MAX, 128, 64, 32, 16):
        if M % t == 0:
            return t
    return min(TM_MAX, _round_up(M, 16))


def _pick_tn(Np):
    if Np % 256 == 0:
        return 256                # >=2 N tiles for cout>=512 -> both v7x TCs busy
    if Np % 128 == 0:
        return 128
    return Np                     # cout=64: full (allowed as full-dim block)


# ---------------------------------------------------------------------------
# Fused conv kernel:  sum_t A_t @ W_t  + bias (+ residual) (+ ReLU)
# ---------------------------------------------------------------------------

def _conv_kernel(w_ref, bias_ref, *rest, ntaps, relu, has_res):
    o_ref = rest[-1]
    a_refs = rest[:ntaps]
    acc = jnp.dot(a_refs[0][...], w_ref[0], preferred_element_type=jnp.float32)
    for t in range(1, ntaps):
        acc = acc + jnp.dot(a_refs[t][...], w_ref[t],
                            preferred_element_type=jnp.float32)
    acc = acc + bias_ref[...]
    if has_res:
        acc = acc + rest[ntaps][...].astype(jnp.float32)
    if relu:
        acc = jnp.maximum(acc, 0.0)
    o_ref[...] = acc.astype(o_ref.dtype)


def fused_conv_matmul(a_list, wm, bias, res=None, *, relu=True):
    """a_list: ntaps bf16 (M, K) views; wm: bf16 (ntaps, K, Np); bias f32 (1, Np).
    Weight-stationary grid (N outer, M inner), full K per step, bf16 output."""
    M, K = a_list[0].shape
    ntaps, _, Np = wm.shape
    tm = _pick_tm(M)
    Mp = _round_up(M, tm)
    tn = _pick_tn(Np)
    has_res = res is not None

    if has_res:
        res = res.astype(jnp.bfloat16)
    if Mp != M:
        a_list = [jnp.pad(a, ((0, Mp - M), (0, 0))) for a in a_list]
        if has_res:
            res = jnp.pad(res, ((0, Mp - M), (0, 0)))

    operands = [wm, bias, *a_list]
    in_specs = [
        # weight block index constant across the inner (M) axis -> stays resident
        pl.BlockSpec((ntaps, K, tn), lambda j, i: (0, 0, j)),
        pl.BlockSpec((1, tn), lambda j, i: (0, j)),
    ] + [pl.BlockSpec((tm, K), lambda j, i: (i, 0)) for _ in range(ntaps)]
    if has_res:
        operands.append(res)
        in_specs.append(pl.BlockSpec((tm, tn), lambda j, i: (i, j)))

    cost = pl.CostEstimate(
        flops=2 * Mp * K * ntaps * Np,
        transcendentals=0,
        bytes_accessed=2 * (ntaps * Mp * K + ntaps * K * Np
                            + Mp * Np * (1 + int(has_res))) + 4 * Np)

    out = pl.pallas_call(
        functools.partial(_conv_kernel, ntaps=ntaps, relu=relu, has_res=has_res),
        out_shape=jax.ShapeDtypeStruct((Mp, Np), jnp.bfloat16),
        grid_spec=pltpu.PrefetchScalarGridSpec(
            num_scalar_prefetch=0,
            grid=(Np // tn, Mp // tm),       # N outer, M inner (weight-stationary)
            in_specs=in_specs,
            out_specs=pl.BlockSpec((tm, tn), lambda j, i: (i, j)),
        ),
        compiler_params=pltpu.CompilerParams(
            dimension_semantics=("parallel", "parallel"),
            vmem_limit_bytes=VMEM_LIMIT),
        cost_estimate=cost,
    )(*operands)
    return out if Mp == M else out[:M]


# ---------------------------------------------------------------------------
# MaxPool 3x3 / stride 2 / pad 1 : lane-dense, bf16 running max over 9 taps
# ---------------------------------------------------------------------------

def _max9_kernel(*refs):
    o_ref = refs[-1]
    m = refs[0][...]
    for r in refs[1:-1]:
        m = jnp.maximum(m, r[...])
    o_ref[...] = m


def _pick_pool_tile(rows):
    for t in (512, 256, 128, 64, 32, 16, 8):
        if rows % t == 0:
            return t
    return min(512, _round_up(rows, 8))


@jax.jit
def maxpool_3x3_s2_p1(x):
    N, H, W, C = x.shape
    # Input is post-ReLU (>= 0), so zero padding is equivalent to -inf padding.
    xp = jnp.pad(x, ((0, 0), (1, 1), (1, 1), (0, 0)))
    OH = (H + 2 - 3) // 2 + 1
    OW = (W + 2 - 3) // 2 + 1
    M = N * OH * OW
    # Fold pixels into lanes so the store path is lane-dense (C=64 < 128 lanes).
    lane = 128 if (M * C) % 128 == 0 else C
    rows = (M * C) // lane
    views = [xp[:, i:i + 2 * OH:2, j:j + 2 * OW:2, :].reshape(rows, lane)
             for i in range(3) for j in range(3)]
    tme = _pick_pool_tile(rows)
    Rp = _round_up(rows, tme)
    if Rp != rows:
        views = [jnp.pad(v, ((0, Rp - rows), (0, 0))) for v in views]

    out = pl.pallas_call(
        _max9_kernel,
        out_shape=jax.ShapeDtypeStruct((Rp, lane), x.dtype),
        grid_spec=pltpu.PrefetchScalarGridSpec(
            num_scalar_prefetch=0,
            grid=(Rp // tme,),
            in_specs=[pl.BlockSpec((tme, lane), lambda i: (i, 0))] * 9,
            out_specs=pl.BlockSpec((tme, lane), lambda i: (i, 0)),
        ),
        compiler_params=pltpu.CompilerParams(
            dimension_semantics=("parallel",),
            vmem_limit_bytes=VMEM_LIMIT),
    )(*views)
    if Rp != rows:
        out = out[:rows]
    return out.reshape(N, OH, OW, C)


# ---------------------------------------------------------------------------
# Global average pool (AdaptiveAvgPool2d((1,1))) : tiled over channels
# ---------------------------------------------------------------------------

def _gap_kernel(x_ref, o_ref):
    o_ref[...] = jnp.mean(x_ref[...].astype(jnp.float32), axis=1)


@jax.jit
def global_avg_pool(x):
    """(N, HW, C) bf16 -> (N, C) f32."""
    N, HW, C = x.shape
    tc = 512 if C % 512 == 0 else C
    return pl.pallas_call(
        _gap_kernel,
        out_shape=jax.ShapeDtypeStruct((N, C), jnp.float32),
        grid_spec=pltpu.PrefetchScalarGridSpec(
            num_scalar_prefetch=0,
            grid=(C // tc,),
            in_specs=[pl.BlockSpec((N, HW, tc), lambda i: (0, 0, i))],
            out_specs=pl.BlockSpec((N, tc), lambda i: (0, i)),
        ),
        compiler_params=pltpu.CompilerParams(
            dimension_semantics=("parallel",),
            vmem_limit_bytes=VMEM_LIMIT),
    )(x)


# ---------------------------------------------------------------------------
# Conv + folded BN (+ ReLU) (+ fused residual) glue
# ---------------------------------------------------------------------------

def _tap_views(x, kh, kw, stride, pad):
    """kh*kw shifted views, each (M, C) -- no im2col concat in HBM."""
    N, H, W, C = x.shape
    xp = jnp.pad(x, ((0, 0), (pad, pad), (pad, pad), (0, 0)))
    OH = (H + 2 * pad - kh) // stride + 1
    OW = (W + 2 * pad - kw) // stride + 1
    M = N * OH * OW
    views = [xp[:, i:i + stride * OH:stride, j:j + stride * OW:stride, :].reshape(M, C)
             for i in range(kh) for j in range(kw)]
    return views, OH, OW


def im2col(x, kh, kw, stride, pad):
    """(ki, kj, c)-ordered patches; used only for the 7x7 Cin=3 stem conv."""
    N, H, W, C = x.shape
    xp = jnp.pad(x, ((0, 0), (pad, pad), (pad, pad), (0, 0)))
    OH = (H + 2 * pad - kh) // stride + 1
    OW = (W + 2 * pad - kw) // stride + 1
    cols = [xp[:, i:i + stride * OH:stride, j:j + stride * OW:stride, :]
            for i in range(kh) for j in range(kw)]
    return jnp.concatenate(cols, axis=-1), OH, OW


@functools.partial(jax.jit, static_argnames=("kh", "kw", "stride", "pad",
                                              "cout", "relu", "mode", "kdim"))
def _conv_bn_impl(x, wm, bias, res, *, kh, kw, stride, pad, cout, relu, mode, kdim):
    N, H, W, C = x.shape
    if mode == "taps":
        if kh == 1 and kw == 1:
            xs = x[:, ::stride, ::stride, :] if stride != 1 else x
            OH, OW = xs.shape[1], xs.shape[2]
            a_list = [xs.reshape(N * OH * OW, C)]
        else:
            a_list, OH, OW = _tap_views(x, kh, kw, stride, pad)
    else:  # im2col (stem conv only)
        patches, OH, OW = im2col(x, kh, kw, stride, pad)
        M = N * OH * OW
        K = kh * kw * C
        A = patches.reshape(M, K)
        if kdim != K:
            A = jnp.pad(A, ((0, 0), (0, kdim - K)))
        a_list = [A]
    res2d = None if res is None else res.reshape(N * OH * OW, cout)
    out = fused_conv_matmul(a_list, wm, bias, res2d, relu=relu)
    return out.reshape(N, OH, OW, cout)


def conv_bn(x, fp, relu=True, res=None):
    return _conv_bn_impl(x, fp["w"], fp["b"], res,
                         kh=fp["kh"], kw=fp["kw"], stride=fp["stride"],
                         pad=fp["pad"], cout=fp["cout"], relu=relu,
                         mode=fp["mode"], kdim=fp["kdim"])


def bottleneck_forward(x, p):
    if "down" in p:
        identity = conv_bn(x, p["down"], relu=False)
    else:
        identity = x
    out = conv_bn(x, p["c1"], relu=True)
    out = conv_bn(out, p["c2"], relu=True)
    # conv3 + BN + residual add + ReLU fused into one matmul epilogue.
    out = conv_bn(out, p["c3"], relu=True, res=identity)
    return out


def extractnodef_forward(params, x_nchw):
    """ResNet-50 without the final fc, like `extractnodefModel.forward`."""
    x = jnp.transpose(x_nchw, (0, 2, 3, 1)).astype(jnp.bfloat16)   # NCHW -> NHWC
    x = conv_bn(x, params["conv1"], relu=True)
    x = maxpool_3x3_s2_p1(x)
    for layer in ("layer1", "layer2", "layer3", "layer4"):
        for blk in params[layer]:
            x = bottleneck_forward(x, blk)
    N, H, W, C = x.shape
    pooled = global_avg_pool(x.reshape(N, H * W, C))   # (N, 2048) f32
    return pooled.reshape(N, C, 1, 1)                  # NCHW, matches torch


# ---------------------------------------------------------------------------
# One-time parameter preparation: fold BN, transpose, cast to bf16
# ---------------------------------------------------------------------------

def fold_conv_bn(w, bn, stride, pad, mode="taps"):
    cout, cin, kh, kw = w.shape
    scale = bn["gamma"] / jnp.sqrt(bn["var"] + 1e-5)
    bias = (bn["beta"] - bn["mean"] * scale).reshape(1, cout).astype(jnp.float32)
    whwc = jnp.transpose(w, (2, 3, 1, 0)) * scale          # (kh, kw, cin, cout)
    if mode == "taps":
        wm = whwc.reshape(kh * kw, cin, cout).astype(jnp.bfloat16)
        kdim = cin
    else:  # im2col weight layout (1, Kp, cout); Kp padded for clean MXU K
        K = kh * kw * cin
        kdim = _round_up(K, 128)
        wm = jnp.pad(whwc.reshape(K, cout), ((0, kdim - K), (0, 0)))
        wm = wm.astype(jnp.bfloat16)[None]
    return dict(w=wm, b=bias, kh=kh, kw=kw, stride=stride, pad=pad,
                cin=cin, cout=cout, mode=mode, kdim=kdim)


def prepare_resnet50(raw):
    p = {"conv1": fold_conv_bn(raw["conv1"], raw["bn1"], stride=2, pad=3,
                               mode="im2col")}
    for name in ("layer1", "layer2", "layer3", "layer4"):
        blocks = []
        for blk in raw[name]:
            fb = {
                "c1": fold_conv_bn(blk["conv1"], blk["bn1"], 1, 0),
                "c2": fold_conv_bn(blk["conv2"], blk["bn2"], blk["stride"], 1),
                "c3": fold_conv_bn(blk["conv3"], blk["bn3"], 1, 0),
            }
            if "down_conv" in blk:
                fb["down"] = fold_conv_bn(blk["down_conv"], blk["down_bn"],
                                          blk["stride"], 0)
            blocks.append(fb)
        p[name] = blocks
    return p


# ---------------------------------------------------------------------------
# Deterministic synthetic parameters (shapes identical to torchvision resnet50)
# ---------------------------------------------------------------------------

def conv_params(key, cout, cin, kh, kw):
    fan_in = cin * kh * kw
    return jax.random.normal(key, (cout, cin, kh, kw), jnp.float32) * math.sqrt(2.0 / fan_in)


def bn_params(key, c):
    k1, k2, k3, k4 = jax.random.split(key, 4)
    return dict(
        gamma=jax.random.uniform(k1, (c,), jnp.float32, 0.8, 1.2),
        beta=jax.random.normal(k2, (c,), jnp.float32) * 0.05,
        mean=jax.random.normal(k3, (c,), jnp.float32) * 0.05,
        var=jax.random.uniform(k4, (c,), jnp.float32, 0.8, 1.2),
    )


def make_bottleneck_params(key, inplanes, planes, stride, downsample):
    ks = jax.random.split(key, 8)
    p = {
        "conv1": conv_params(ks[0], planes, inplanes, 1, 1),
        "bn1": bn_params(ks[1], planes),
        "conv2": conv_params(ks[2], planes, planes, 3, 3),
        "bn2": bn_params(ks[3], planes),
        "conv3": conv_params(ks[4], planes * 4, planes, 1, 1),
        "bn3": bn_params(ks[5], planes * 4),
        "stride": stride,
    }
    if downsample:
        p["down_conv"] = conv_params(ks[6], planes * 4, inplanes, 1, 1)
        p["down_bn"] = bn_params(ks[7], planes * 4)
    return p


def make_resnet50_params(key):
    keys = iter(jax.random.split(key, 64))
    params = {
        "conv1": conv_params(next(keys), 64, 3, 7, 7),
        "bn1": bn_params(next(keys), 64),
    }
    cfg = [("layer1", 64, 3, 1), ("layer2", 128, 4, 2),
           ("layer3", 256, 6, 2), ("layer4", 512, 3, 2)]
    inplanes = 64
    for name, planes, blocks, stride in cfg:
        layer = []
        for b in range(blocks):
            s = stride if b == 0 else 1
            ds = (b == 0) and (s != 1 or inplanes != planes * 4)
            layer.append(make_bottleneck_params(next(keys), inplanes, planes, s, ds))
            inplanes = planes * 4
        params[name] = layer
    return params


# ---------------------------------------------------------------------------

if __name__ == "__main__":
    key = jax.random.PRNGKey(0)
    pkey, xkey = jax.random.split(key)
    raw_params = make_resnet50_params(pkey)
    params = prepare_resnet50(raw_params)        # one-time fold/cast/layout

    # Small ResNet-compatible input: batch=2, 3 channels, 64x64 spatial (NCHW).
    x = jax.random.normal(xkey, (2, 3, 64, 64), jnp.float32)

    out = extractnodef_forward(params, x)
    out = jax.block_until_ready(out)

    assert out.shape == (2, 2048, 1, 1), out.shape
    assert out.dtype == jnp.float32
    assert bool(jnp.all(jnp.isfinite(out)))
    print("KERNEL_OK")
</pallas_src>

<mosaic_0001>
module attributes {stable_mosaic.version = 11 : i64} {
  func.func @_conv_kernel(%arg0: i32, %arg1: i32, %arg2: memref<1x256x64xbf16, #tpu.memory_space<vmem>>, %arg3: memref<1x64xf32, #tpu.memory_space<vmem>>, %arg4: memref<256x256xbf16, #tpu.memory_space<vmem>>, %arg5: memref<256x64xbf16, #tpu.memory_space<vmem>>) attributes {dimension_semantics = [#tpu.dimension_semantics<parallel>, #tpu.dimension_semantics<parallel>], iteration_bounds = array<i64: 1, 8>, scalar_prefetch = 0 : i64, scratch_operands = 0 : i64, tpu.core_type = #tpu.core_type<tc>, window_params = [{transform_indices = @transform_0, window_bounds = array<i64: 1, 256, 64>}, {transform_indices = @transform_1, window_bounds = array<i64: 1, 64>}, {transform_indices = @transform_2, window_bounds = array<i64: 256, 256>}, {transform_indices = @transform_3, window_bounds = array<i64: 256, 64>}]} {
    %c0 = arith.constant 0 : index
    %c0_0 = arith.constant 0 : index
    %0 = vector.load %arg4[%c0, %c0_0] : memref<256x256xbf16, #tpu.memory_space<vmem>>, vector<256x256xbf16>
    %c0_1 = arith.constant 0 : index
    %c0_2 = arith.constant 0 : index
    %c0_3 = arith.constant 0 : index
    %1 = vector.load %arg2[%c0_1, %c0_2, %c0_3] : memref<1x256x64xbf16, #tpu.memory_space<vmem>>, vector<1x256x64xbf16>
    %2 = vector.shape_cast %1 : vector<1x256x64xbf16> to vector<256x64xbf16>
    %cst = arith.constant dense<0.000000e+00> : vector<256x64xf32>
    %3 = tpu.matmul %0, %2, %cst {dimension_numbers = #tpu.dot_dimension_numbers<[1], [0], [0], [1], [0, 0, 1, 1], [], []>} : vector<256x256xbf16>, vector<256x64xbf16>, vector<256x64xf32> -> vector<256x64xf32>
    %c0_4 = arith.constant 0 : index
    %c0_5 = arith.constant 0 : index
    %4 = vector.load %arg3[%c0_4, %c0_5] : memref<1x64xf32, #tpu.memory_space<vmem>>, vector<1x64xf32>
    %5 = vector.broadcast %4 : vector<1x64xf32> to vector<256x64xf32>
    %6 = arith.addf %3, %5 : vector<256x64xf32>
    %cst_6 = arith.constant 0.000000e+00 : f32
    %7 = vector.broadcast %cst_6 : f32 to vector<256x64xf32>
    %8 = arith.maximumf %6, %7 : vector<256x64xf32>
    %9 = arith.truncf %8 : vector<256x64xf32> to vector<256x64xbf16>
    %c0_7 = arith.constant 0 : index
    %c0_8 = arith.constant 0 : index
    %10 = vector.load %arg5[%c0_7, %c0_8] : memref<256x64xbf16, #tpu.memory_space<vmem>>, vector<256x64xbf16>
    tpu.vector_store %arg5[%c0_7, %c0_8], %9 {strides = array<i32>} : memref<256x64xbf16, #tpu.memory_space<vmem>>, vector<256x64xbf16>,
    return
  }
  func.func @transform_0(%arg0: i32, %arg1: i32) -> (i32, i32, i32) {
    %c0_i32 = arith.constant 0 : i32
    %c0_i32_0 = arith.constant 0 : i32
    %c0_i32_1 = arith.constant 0 : i32
    return %c0_i32, %c0_i32_0, %arg0 : i32, i32, i32
  }
  func.func @transform_1(%arg0: i32, %arg1: i32) -> (i32, i32) {
    %c0_i32 = arith.constant 0 : i32
    %c0_i32_0 = arith.constant 0 : i32
    return %c0_i32, %arg0 : i32, i32
  }
  func.func @transform_2(%arg0: i32, %arg1: i32) -> (i32, i32) {
    %c0_i32 = arith.constant 0 : i32
    %c0_i32_0 = arith.constant 0 : i32
    return %arg1, %c0_i32 : i32, i32
  }
  func.func @transform_3(%arg0: i32, %arg1: i32) -> (i32, i32) {
    %c0_i32 = arith.constant 0 : i32
    return %arg1, %arg0 : i32, i32
  }
}

</mosaic_0001>

<llo_original>
// kernel: _conv_bn_impl.1
$region0: #{_conv_bn_impl.1}
  #allocation0 [shape = 'u32[]', space=smem, size = 0x4, offset = 0x4, fixed_abs, tag = 'smem constant byte address 0x4 - core index']
  #allocation1 [shape = 'u32[144,128]{1,0:T(1,128)}', space=vmem, size = 0x12000, scoped, tag = 'internal scratch']
  %s0 = inlined_call_operand.vmem [shape: bf16[1,256,64], index: 0, kind: input, shape index: {}]
  %s1 = inlined_call_operand.vmem [shape: f32[1,64], index: 1, kind: input, shape index: {}]
  %s2 = inlined_call_operand.vmem [shape: bf16[2048,256], index: 2, kind: input, shape index: {}]
  %s3 = inlined_call_operand.hbm [shape: bf16[2048,64], index: 3, kind: output, shape index: {}]
  %s4 = sld [smem:[#allocation0]]
  $region45: #{_conv_bn_impl.1} parent=0
    _
  %s6 = ssub.s32 1, %s4
  %s7 = scalar_select 0, %s6, %s4
  $region1: #{_conv_bn_impl.1} parent=0
    #allocation2 [shape = 'u8[131072]{0}', space=vmem, size = 0x20000, scoped, tag = 'output window, operand 0']
    #allocation3 [shape = 's32[2]{0}', space=sflag, size = 0x8, scoped, tag = 'scoped memory for _conv_bn_impl.1']
    %8 = vsyncpa [#allocation3], 0
    %s9 = scalar_lea.sflag [#allocation3], 1
    %10 = vsyncpa %s9, 0
    loop: start=0, step=1, limit=10
    $region2: #{_conv_bn_impl.1} parent=1 // loop_pre_header
      _
    $region3: #{_conv_bn_impl.1} parent=1 // loop_header
      %s12 = sphi 0, %s16
      %p13 = scmp.ge.s32.totalorder %s12, 10
      %s19 = sphi 0, %s31
      %s20 = sphi 0, %s27
      %s21 = sphi 0, %s19
      %s22 = sphi 0, %s20
      %s23 = sphi 0, %s21
      %s24 = sphi 0, %s22
      %s34 = sphi 0, %s36
      %s37 = sphi 0, %s34
      %s38 = sphi 0, %s37
      %s54 = sphi 0, %s38
      %s60 = sphi 0, %s62
      %s63 = sphi 0, %s60
      %s64 = sphi 0, %s63
      %s80 = sphi 0, %s64
      %s86 = sphi 0, %s88
      %s89 = sphi 0, %s86
      %s90 = sphi 0, %s89
      %s106 = sphi 0, %s90
      %s114 = sphi 0, %s116
      %s117 = sphi 0, %s114
      %s118 = sphi 0, %s117
      %s134 = sphi 0, %s118
    $region4: #{_conv_bn_impl.1} parent=1 // loop_header_branch
      %15 = sbr.rel (%p13) target = $region8
    $region5: #{_conv_bn_impl.1} parent=1 // loop_body
      %s17 = ssub.s32 %s12, 1
      %s18 = ssub.s32 %s12, 2
      %s25 = sadd.s32 1, %s20
      %p26 = scmp.ge.s32.totalorder %s25, 8
      %s27 = scalar_select %p26, 0, %s25
      %s28 = sadd.s32 1, %s19
      %s29 = scalar_select %p26, %s28, %s19
      %p30 = scmp.ge.s32.totalorder %s29, 1
      %s31 = scalar_select %p30, 0, %s29
      %s32 = ssub.s32 %s19, %s31
      %p33 = scmp.eq.s32.totalorder %s32, 0
      %s35 = sadd.s32 %s34, 1
      %s36 = scalar_select %p33, %s34, %s35
      %p39 = pneg %p33
      %p40 = scmp.eq.s32.totalorder %s12, 7
      %p41 = por %p39, %p40
      %p42 = scmp.ne.s32.totalorder %s34, %s37
      %p43 = scmp.eq.s32.totalorder %s12, 0
      %p44 = por %p42, %p43
      %p45 = scmp.ne.s32.totalorder %s34, %s37
      %p46 = scmp.eq.s32.totalorder %s17, 7
      %p47 = por %p45, %p46
      %p48 = scmp.ne.s32.totalorder %s37, %s38
      %p49 = scmp.eq.s32.totalorder %s17, 0
      %p50 = por %p48, %p49
      %p51 = scmp.ne.s32.totalorder %s37, %s38
      %p52 = scmp.eq.s32.totalorder %s18, 7
      %p53 = por %p51, %p52
      %p55 = scmp.ne.s32.totalorder %s38, %s54
      %p56 = scmp.eq.s32.totalorder %s18, 0
      %p57 = por %p55, %p56
      %s58 = ssub.s32 %s19, %s31
      %p59 = scmp.eq.s32.totalorder %s58, 0
      %s61 = sadd.s32 %s60, 1
      %s62 = scalar_select %p59, %s60, %s61
      %p65 = pneg %p59
      %p66 = scmp.eq.s32.totalorder %s12, 7
      %p67 = por %p65, %p66
      %p68 = scmp.ne.s32.totalorder %s60, %s63
      %p69 = scmp.eq.s32.totalorder %s12, 0
      %p70 = por %p68, %p69
      %p71 = scmp.ne.s32.totalorder %s60, %s63
      %p72 = scmp.eq.s32.totalorder %s17, 7
      %p73 = por %p71, %p72
      %p74 = scmp.ne.s32.totalorder %s63, %s64
      %p75 = scmp.eq.s32.totalorder %s17, 0
      %p76 = por %p74, %p75
      %p77 = scmp.ne.s32.totalorder %s63, %s64
      %p78 = scmp.eq.s32.totalorder %s18, 7
      %p79 = por %p77, %p78
      %p81 = scmp.ne.s32.totalorder %s64, %s80
      %p82 = scmp.eq.s32.totalorder %s18, 0
      %p83 = por %p81, %p82
      %s84 = ssub.s32 %s20, %s27
      %p85 = scmp.eq.s32.totalorder %s84, 0
      %s87 = sadd.s32 %s86, 1
      %s88 = scalar_select %p85, %s86, %s87
      %p91 = pneg %p85
      %p92 = scmp.eq.s32.totalorder %s12, 7
      %p93 = por %p91, %p92
      %p94 = scmp.ne.s32.totalorder %s86, %s89
      %p95 = scmp.eq.s32.totalorder %s12, 0
      %p96 = por %p94, %p95
      %p97 = scmp.ne.s32.totalorder %s86, %s89
      %p98 = scmp.eq.s32.totalorder %s17, 7
      %p99 = por %p97, %p98
      %p100 = scmp.ne.s32.totalorder %s89, %s90
      %p101 = scmp.eq.s32.totalorder %s17, 0
      %p102 = por %p100, %p101
      %p103 = scmp.ne.s32.totalorder %s89, %s90
      %p104 = scmp.eq.s32.totalorder %s18, 7
      %p105 = por %p103, %p104
      %p107 = scmp.ne.s32.totalorder %s90, %s106
      %p108 = scmp.eq.s32.totalorder %s18, 0
      %p109 = por %p107, %p108
      %s110 = ssub.s32 %s20, %s27
      %s111 = ssub.s32 %s19, %s31
      %s112 = sor.u32 %s110, %s111
      %p113 = scmp.eq.s32.totalorder %s112, 0
      %s115 = sadd.s32 %s114, 1
      %s116 = scalar_select %p113, %s114, %s115
      %p119 = pneg %p113
      %p120 = scmp.eq.s32.totalorder %s12, 7
      %p121 = por %p119, %p120
      %p122 = scmp.ne.s32.totalorder %s114, %s117
      %p123 = scmp.eq.s32.totalorder %s12, 0
      %p124 = por %p122, %p123
      %p125 = scmp.ne.s32.totalorder %s114, %s117
      %p126 = scmp.eq.s32.totalorder %s17, 7
      %p127 = por %p125, %p126
      %p128 = scmp.ne.s32.totalorder %s117, %s118
      %p129 = scmp.eq.s32.totalorder %s17, 0
      %p130 = por %p128, %p129
      %p131 = scmp.ne.s32.totalorder %s117, %s118
      %p132 = scmp.eq.s32.totalorder %s18, 7
      %p133 = por %p131, %p132
      %p135 = scmp.ne.s32.totalorder %s118, %s134
      %p136 = scmp.eq.s32.totalorder %s18, 0
      %p137 = por %p135, %p136
      %p138 = scmp.le.s32.totalorder 1, %s12
      %p139 = scmp.lt.s32.totalorder %s12, 9
      %p140 = pnand %p138, %p139
      %p141 = pneg %p140
      // Predicated region
      $region9: #{_conv_bn_impl.1} parent=5 // pred_check
        _
      $region10: #{_conv_bn_impl.1} parent=5 // pred_check_branch
        %143 = sbr.rel (%p140) target = $region12
      $region11: #{_conv_bn_impl.1} parent=5 // pred_region
        %s144 = ssub.s32 %s12, 1
        // Predicated region
        $region13: #{_conv_bn_impl.1} parent=11 // pred_check
          %p145 = pneg %p50
        $region14: #{_conv_bn_impl.1} parent=11 // pred_check_branch
          %147 = sbr.rel (%p145) target = $region16
        $region15: #{_conv_bn_impl.1} parent=11 // pred_region
          %p148 = scmp.lt.s32.totalorder %s21, 0
          %s149 = scalar_select %p148, %s21, 0
          %s150 = smul.addr %s149, 4
          %s151 = scalar_lea.vmem %s0, %s150
        $region16: #{_conv_bn_impl.1} parent=11 // pred_fallthru
          _
        // Predicated region
        $region17: #{_conv_bn_impl.1} parent=11 // pred_check
          %p152 = pneg %p76
        $region18: #{_conv_bn_impl.1} parent=11 // pred_check_branch
          %154 = sbr.rel (%p152) target = $region20
        $region19: #{_conv_bn_impl.1} parent=11 // pred_region
          %p155 = scmp.lt.s32.totalorder %s21, 0
          %s156 = scalar_select %p155, %s21, 0
          %s157 = scalar_lea.vmem %s1, %s156
        $region20: #{_conv_bn_impl.1} parent=11 // pred_fallthru
          _
      $region12: #{_conv_bn_impl.1} parent=5 // pred_fallthru
        _
      %p158 = scmp.lt.s32.totalorder %s12, 8
      // Predicated region
      $region21: #{_conv_bn_impl.1} parent=5 // pred_check
        %p159 = pneg %p158
      $region22: #{_conv_bn_impl.1} parent=5 // pred_check_branch
        %161 = sbr.rel (%p159) target = $region24
      $region23: #{_conv_bn_impl.1} parent=5 // pred_region
        // Predicated region
        $region25: #{_conv_bn_impl.1} parent=23 // pred_check
          %p162 = pneg %p96
        $region26: #{_conv_bn_impl.1} parent=23 // pred_check_branch
          %164 = sbr.rel (%p162) target = $region28
        $region27: #{_conv_bn_impl.1} parent=23 // pred_region
          %s165 = smul.u32 32, %s20
          %p166 = scmp.lt.s32.totalorder %s165, 255
          %s167 = scalar_select %p166, %s165, 255
          %s168 = smul.addr %s167, 2
          %s169 = smul.addr %s168, 4
          %s170 = scalar_lea.vmem %s2, %s169
          %s171 = smul.u32 32, %s20
        $region28: #{_conv_bn_impl.1} parent=23 // pred_fallthru
          _
      $region24: #{_conv_bn_impl.1} parent=5 // pred_fallthru
        _
      %p172 = scmp.le.s32.totalorder 1, %s12
      %p173 = scmp.lt.s32.totalorder %s12, 9
      %p174 = pnand %p172, %p173
      %p175 = pneg %p174
      // Predicated region
      $region29: #{_conv_bn_impl.1} parent=5 // pred_check
        _
      $region30: #{_conv_bn_impl.1} parent=5 // pred_check_branch
        %177 = sbr.rel (%p174) target = $region32
      $region31: #{_conv_bn_impl.1} parent=5 // pred_region
        %s178 = ssub.s32 %s12, 1
        %p179 = scmp.lt.s32.totalorder %s21, 0
        %s180 = scalar_select %p179, %s21, 0
        %s181 = smul.addr %s180, 4
        %s182 = scalar_lea.vmem %s0, %s181
        %p183 = pneg %p50
        %p184 = pneg %p47
        %p185 = scmp.lt.s32.totalorder %s21, 0
        %s186 = scalar_select %p185, %s21, 0
        %s187 = scalar_lea.vmem %s1, %s186
        %p188 = pneg %p76
        %p189 = pneg %p73
        %s190 = smul.u32 32, %s22
        %p191 = scmp.lt.s32.totalorder %s190, 255
        %s192 = scalar_select %p191, %s190, 255
        %s193 = smul.addr %s192, 2
        %s194 = smul.addr %s193, 4
        %s195 = scalar_lea.vmem %s2, %s194
        %p196 = pneg %p102
        %p197 = pneg %p99
        %p198 = pneg %p130
        %p199 = pneg %p127
        %s200 = sand.u32 %s117, 1
        %s201 = scalar_lea.sflag [#allocation3], %s200
        %s202 = sand.u32 %s117, 1
        %s203 = smul.addr %s202, 128
        %s204 = scalar_lea.vmem [#allocation2], %s203
        %p205 = scmp.lt.s32.totalorder %s21, 0
        %s206 = scalar_select %p205, %s21, 0
        %s207 = smul.addr %s206, 4
        %s208 = scalar_lea.vmem %s0, %s207
        %p209 = scmp.lt.s32.totalorder %s21, 0
        %s210 = scalar_select %p209, %s21, 0
        %s211 = scalar_lea.vmem %s1, %s210
        %s212 = smul.u32 32, %s22
        %p213 = scmp.lt.s32.totalorder %s212, 255
        %s214 = scalar_select %p213, %s212, 255
        %s215 = smul.addr %s214, 2
        %s216 = smul.addr %s215, 4
        %s217 = scalar_lea.vmem %s2, %s216
        %s218 = smul.u32 32, %s22
        %s219 = smul.u32 32, %s22
        %v221 = vld [vmem:[%s217] sm:$0xff]
        %v222 = vld [vmem:[%s217 + $0x8] sm:$0xff]
        %v223 = vld [vmem:[%s217 + $0x10] sm:$0xff]
        %v224 = vld [vmem:[%s217 + $0x18] sm:$0xff]
        %v225 = vld [vmem:[%s217 + $0x20] sm:$0xff]
        %v226 = vld [vmem:[%s217 + $0x28] sm:$0xff]
        %v227 = vld [vmem:[%s217 + $0x30] sm:$0xff]
        %v228 = vld [vmem:[%s217 + $0x38] sm:$0xff]
        %v229 = vld [vmem:[%s217 + $0x40] sm:$0xff]
        %v230 = vld [vmem:[%s217 + $0x48] sm:$0xff]
        %v231 = vld [vmem:[%s217 + $0x50] sm:$0xff]
        %v232 = vld [vmem:[%s217 + $0x58] sm:$0xff]
        %v233 = vld [vmem:[%s217 + $0x60] sm:$0xff]
        %v234 = vld [vmem:[%s217 + $0x68] sm:$0xff]
        %v235 = vld [vmem:[%s217 + $0x70] sm:$0xff]
        %v236 = vld [vmem:[%s217 + $0x78] sm:$0xff]
        %v237 = vld [vmem:[%s217 + $0x80] sm:$0xff]
        %v238 = vld [vmem:[%s217 + $0x88] sm:$0xff]
        %v239 = vld [vmem:[%s217 + $0x90] sm:$0xff]
        %v240 = vld [vmem:[%s217 + $0x98] sm:$0xff]
        %v241 = vld [vmem:[%s217 + $0xa0] sm:$0xff]
        %v242 = vld [vmem:[%s217 + $0xa8] sm:$0xff]
        %v243 = vld [vmem:[%s217 + $0xb0] sm:$0xff]
        %v244 = vld [vmem:[%s217 + $0xb8] sm:$0xff]
        %v245 = vld [vmem:[%s217 + $0xc0] sm:$0xff]
        %v246 = vld [vmem:[%s217 + $0xc8] sm:$0xff]
        %v247 = vld [vmem:[%s217 + $0xd0] sm:$0xff]
        %v248 = vld [vmem:[%s217 + $0xd8] sm:$0xff]
        %v249 = vld [vmem:[%s217 + $0xe0] sm:$0xff]
        %v250 = vld [vmem:[%s217 + $0xe8] sm:$0xff]
        %v251 = vld [vmem:[%s217 + $0xf0] sm:$0xff]
        %v252 = vld [vmem:[%s217 + $0xf8] sm:$0xff]
        %v253 = vld [vmem:[%s208] sm:$0xf]
        %v254 = vld [vmem:[%s208 + $0x4] sm:$0xf]
        %v255 = vld [vmem:[%s208 + $0x8] sm:$0xf]
        %v256 = vld [vmem:[%s208 + $0xc] sm:$0xf]
        %v257 = vld [vmem:[%s208 + $0x10] sm:$0xf]
        %v258 = vld [vmem:[%s208 + $0x14] sm:$0xf]
        %v259 = vld [vmem:[%s208 + $0x18] sm:$0xf]
        %v260 = vld [vmem:[%s208 + $0x1c] sm:$0xf]
        %v261 = vld [vmem:[%s208 + $0x20] sm:$0xf]
        %v262 = vld [vmem:[%s208 + $0x24] sm:$0xf]
        %v263 = vld [vmem:[%s208 + $0x28] sm:$0xf]
        %v264 = vld [vmem:[%s208 + $0x2c] sm:$0xf]
        %v265 = vld [vmem:[%s208 + $0x30] sm:$0xf]
        %v266 = vld [vmem:[%s208 + $0x34] sm:$0xf]
        %v267 = vld [vmem:[%s208 + $0x38] sm:$0xf]
        %v268 = vld [vmem:[%s208 + $0x3c] sm:$0xf]
        %v269 = vld [vmem:[%s208 + $0x40] sm:$0xf]
        %v270 = vld [vmem:[%s208 + $0x44] sm:$0xf]
        %v271 = vld [vmem:[%s208 + $0x48] sm:$0xf]
        %v272 = vld [vmem:[%s208 + $0x4c] sm:$0xf]
        %v273 = vld [vmem:[%s208 + $0x50] sm:$0xf]
        %v274 = vld [vmem:[%s208 + $0x54] sm:$0xf]
        %v275 = vld [vmem:[%s208 + $0x58] sm:$0xf]
        %v276 = vld [vmem:[%s208 + $0x5c] sm:$0xf]
        %v277 = vld [vmem:[%s208 + $0x60] sm:$0xf]
        %v278 = vld [vmem:[%s208 + $0x64] sm:$0xf]
        %v279 = vld [vmem:[%s208 + $0x68] sm:$0xf]
        %v280 = vld [vmem:[%s208 + $0x6c] sm:$0xf]
        %v281 = vld [vmem:[%s208 + $0x70] sm:$0xf]
        %v282 = vld [vmem:[%s208 + $0x74] sm:$0xf]
        %v283 = vld [vmem:[%s208 + $0x78] sm:$0xf]
        %v284 = vld [vmem:[%s208 + $0x7c] sm:$0xf]
        %v285 = vld [vmem:[%s211] sm:$0x1]
        %v287 = vlaneseq
        %v288 = vshrl.u32 %v287, 7
        %v289 = vsub.s32 0, %v288
        %v290 = vrot.slane %v285, %v289
        %v324 = vunpack.c.l.b16 %v221
        %v325 = vunpack.c.h.b16 %v221
        %v326 = vunpack.c.l.b16 %v222
        %v327 = vunpack.c.h.b16 %v222
        %v328 = vunpack.c.l.b16 %v223
        %v329 = vunpack.c.h.b16 %v223
        %v330 = vunpack.c.l.b16 %v224
        %v331 = vunpack.c.h.b16 %v224
        %v332 = vunpack.c.l.b16 %v225
        %v333 = vunpack.c.h.b16 %v225
        %v334 = vunpack.c.l.b16 %v226
        %v335 = vunpack.c.h.b16 %v226
        %v336 = vunpack.c.l.b16 %v227
        %v337 = vunpack.c.h.b16 %v227
        %v338 = vunpack.c.l.b16 %v228
        %v339 = vunpack.c.h.b16 %v228
        %v340 = vunpack.c.l.b16 %v229
        %v341 = vunpack.c.h.b16 %v229
        %v342 = vunpack.c.l.b16 %v230
        %v343 = vunpack.c.h.b16 %v230
        %v344 = vunpack.c.l.b16 %v231
        %v345 = vunpack.c.h.b16 %v231
        %v346 = vunpack.c.l.b16 %v232
        %v347 = vunpack.c.h.b16 %v232
        %v348 = vunpack.c.l.b16 %v233
        %v349 = vunpack.c.h.b16 %v233
        %v350 = vunpack.c.l.b16 %v234
        %v351 = vunpack.c.h.b16 %v234
        %v352 = vunpack.c.l.b16 %v235
        %v353 = vunpack.c.h.b16 %v235
        %v354 = vunpack.c.l.b16 %v236
        %v355 = vunpack.c.h.b16 %v236
        %v356 = vunpack.c.l.b16 %v237
        %v357 = vunpack.c.h.b16 %v237
        %v358 = vunpack.c.l.b16 %v238
        %v359 = vunpack.c.h.b16 %v238
        %v360 = vunpack.c.l.b16 %v239
        %v361 = vunpack.c.h.b16 %v239
        %v362 = vunpack.c.l.b16 %v240
        %v363 = vunpack.c.h.b16 %v240
        %v364 = vunpack.c.l.b16 %v241
        %v365 = vunpack.c.h.b16 %v241
        %v366 = vunpack.c.l.b16 %v242
        %v367 = vunpack.c.h.b16 %v242
        %v368 = vunpack.c.l.b16 %v243
        %v369 = vunpack.c.h.b16 %v243
        %v370 = vunpack.c.l.b16 %v244
        %v371 = vunpack.c.h.b16 %v244
        %v372 = vunpack.c.l.b16 %v245
        %v373 = vunpack.c.h.b16 %v245
        %v374 = vunpack.c.l.b16 %v246
        %v375 = vunpack.c.h.b16 %v246
        %v376 = vunpack.c.l.b16 %v247
        %v377 = vunpack.c.h.b16 %v247
        %v378 = vunpack.c.l.b16 %v248
        %v379 = vunpack.c.h.b16 %v248
        %v380 = vunpack.c.l.b16 %v249
        %v381 = vunpack.c.h.b16 %v249
        %v382 = vunpack.c.l.b16 %v250
        %v383 = vunpack.c.h.b16 %v250
        %v384 = vunpack.c.l.b16 %v251
        %v385 = vunpack.c.h.b16 %v251
        %v386 = vunpack.c.l.b16 %v252
        %v387 = vunpack.c.h.b16 %v252
        %v388 = vpack.c.b16 %v326, %v324
        %v389 = vpack.c.b16 %v327, %v325
        %v390 = vpack.c.b16 %v330, %v328
        %v391 = vpack.c.b16 %v331, %v329
        %v392 = vpack.c.b16 %v334, %v332
        %v393 = vpack.c.b16 %v335, %v333
        %v394 = vpack.c.b16 %v338, %v336
        %v395 = vpack.c.b16 %v339, %v337
        %v396 = vpack.c.b16 %v342, %v340
        %v397 = vpack.c.b16 %v343, %v341
        %v398 = vpack.c.b16 %v346, %v344
        %v399 = vpack.c.b16 %v347, %v345
        %v400 = vpack.c.b16 %v350, %v348
        %v401 = vpack.c.b16 %v351, %v349
        %v402 = vpack.c.b16 %v354, %v352
        %v403 = vpack.c.b16 %v355, %v353
        %v404 = vpack.c.b16 %v358, %v356
        %v405 = vpack.c.b16 %v359, %v357
        %v406 = vpack.c.b16 %v362, %v360
        %v407 = vpack.c.b16 %v363, %v361
        %v408 = vpack.c.b16 %v366, %v364
        %v409 = vpack.c.b16 %v367, %v365
        %v410 = vpack.c.b16 %v370, %v368
        %v411 = vpack.c.b16 %v371, %v369
        %v412 = vpack.c.b16 %v374, %v372
        %v413 = vpack.c.b16 %v375, %v373
        %v414 = vpack.c.b16 %v378, %v376
        %v415 = vpack.c.b16 %v379, %v377
        %v416 = vpack.c.b16 %v382, %v380
        %v417 = vpack.c.b16 %v383, %v381
        %v418 = vpack.c.b16 %v386, %v384
        %v419 = vpack.c.b16 %v387, %v385
        %v484 = vunpack.c.l.b16 %v253
        %v485 = vunpack.c.l.b16 %v254
        %v486 = vunpack.c.l.b16 %v255
        %v487 = vunpack.c.l.b16 %v256
        %v488 = vunpack.c.l.b16 %v257
        %v489 = vunpack.c.l.b16 %v258
        %v490 = vunpack.c.l.b16 %v259
        %v491 = vunpack.c.l.b16 %v260
        %v492 = vunpack.c.l.b16 %v261
        %v493 = vunpack.c.l.b16 %v262
        %v494 = vunpack.c.l.b16 %v263
        %v495 = vunpack.c.l.b16 %v264
        %v496 = vunpack.c.l.b16 %v265
        %v497 = vunpack.c.l.b16 %v266
        %v498 = vunpack.c.l.b16 %v267
        %v499 = vunpack.c.l.b16 %v268
        %v500 = vunpack.c.l.b16 %v269
        %v501 = vunpack.c.l.b16 %v270
        %v502 = vunpack.c.l.b16 %v271
        %v503 = vunpack.c.l.b16 %v272
        %v504 = vunpack.c.l.b16 %v273
        %v505 = vunpack.c.l.b16 %v274
        %v506 = vunpack.c.l.b16 %v275
        %v507 = vunpack.c.l.b16 %v276
        %v508 = vunpack.c.l.b16 %v277
        %v509 = vunpack.c.l.b16 %v278
        %v510 = vunpack.c.l.b16 %v279
        %v511 = vunpack.c.l.b16 %v280
        %v512 = vunpack.c.l.b16 %v281
        %v513 = vunpack.c.l.b16 %v282
        %v514 = vunpack.c.l.b16 %v283
        %v515 = vunpack.c.l.b16 %v284
        %v516 = vpack.c.b16 %v485, %v484
        %v517 = vpack.c.b16 %v487, %v486
        %v518 = vpack.c.b16 %v489, %v488
        %v519 = vpack.c.b16 %v491, %v490
        %v520 = vpack.c.b16 %v493, %v492
        %v521 = vpack.c.b16 %v495, %v494
        %v522 = vpack.c.b16 %v497, %v496
        %v523 = vpack.c.b16 %v499, %v498
        %v524 = vpack.c.b16 %v501, %v500
        %v525 = vpack.c.b16 %v503, %v502
        %v526 = vpack.c.b16 %v505, %v504
        %v527 = vpack.c.b16 %v507, %v506
        %v528 = vpack.c.b16 %v509, %v508
        %v529 = vpack.c.b16 %v511, %v510
        %v530 = vpack.c.b16 %v513, %v512
        %v531 = vpack.c.b16 %v515, %v514
        %548 = vmatprep.subr.bf16.mxu0 0
        %549 = vmatpush1.bf16.msra.mxu0 %v516
        %550 = vmatprep.subr.bf16.mxu0 0
        %551 = vmatpush1.bf16.msra.mxu0 %v517
        %552 = vmatprep.subr.bf16.mxu0 0
        %553 = vmatpush1.bf16.msra.mxu0 %v518
        %554 = vmatprep.subr.bf16.mxu0 0
        %555 = vmatpush1.bf16.msra.mxu0 %v519
        %556 = vmatprep.subr.bf16.mxu0 0
        %557 = vmatpush1.bf16.msra.mxu0 %v520
        %558 = vmatprep.subr.bf16.mxu0 0
        %559 = vmatpush1.bf16.msra.mxu0 %v521
        %560 = vmatprep.subr.bf16.mxu0 0
        %561 = vmatpush1.bf16.msra.mxu0 %v522
        %562 = vmatprep.subr.bf16.mxu0 0
        %563 = vmatpush1.bf16.msra.mxu0 %v523
        %564 = vmatprep.subr.bf16.mxu0 0
        %565 = vmatpush1.bf16.msra.mxu0 %v524
        %566 = vmatprep.subr.bf16.mxu0 0
        %567 = vmatpush1.bf16.msra.mxu0 %v525
        %568 = vmatprep.subr.bf16.mxu0 0
        %569 = vmatpush1.bf16.msra.mxu0 %v526
        %570 = vmatprep.subr.bf16.mxu0 0
        %571 = vmatpush1.bf16.msra.mxu0 %v527
        %572 = vmatprep.subr.bf16.mxu0 0
        %573 = vmatpush1.bf16.msra.mxu0 %v528
        %574 = vmatprep.subr.bf16.mxu0 0
        %575 = vmatpush1.bf16.msra.mxu0 %v529
        %576 = vmatprep.subr.bf16.mxu0 0
        %577 = vmatpush1.bf16.msra.mxu0 %v530
        %578 = vmatprep.subr.bf16.mxu0 0
        %579 = vmatpush1.bf16.msra.mxu0 %v531
        %580 = vmatprep.mubr.bf16.mxu0 %v389
        %581 = vmatmul.mubr.bf16.gmra.mrb[0].mxu0 %v388
        %v582 = vpop.f32.mrb[0].mxu0
        %v583 = vadd.f32 %v290, %v582
        %v584 = vpop.f32.mrb[0].mxu0
        %v585 = vpop.f32.mrb[0].mxu0
        %v586 = vadd.f32 %v290, %v585
        %v587 = vpop.f32.mrb[0].mxu0
        %588 = vmatprep.mubr.bf16.mxu0 %v391
        %589 = vmatmul.mubr.bf16.gmra.mrb[0].mxu0 %v390
        %v590 = vpop.f32.mrb[0].mxu0
        %v591 = vadd.f32 %v290, %v590
        %v592 = vpop.f32.mrb[0].mxu0
        %v593 = vpop.f32.mrb[0].mxu0
        %v594 = vadd.f32 %v290, %v593
        %v595 = vpop.f32.mrb[0].mxu0
        %596 = vmatprep.mubr.bf16.mxu0 %v393
        %597 = vmatmul.mubr.bf16.gmra.mrb[0].mxu0 %v392
        %v598 = vpop.f32.mrb[0].mxu0
        %v599 = vadd.f32 %v290, %v598
        %v600 = vpop.f32.mrb[0].mxu0
        %v601 = vpop.f32.mrb[0].mxu0
        %v602 = vadd.f32 %v290, %v601
        %v603 = vpop.f32.mrb[0].mxu0
        %604 = vmatprep.mubr.bf16.mxu0 %v395
        %605 = vmatmul.mubr.bf16.gmra.mrb[0].mxu0 %v394
        %v606 = vpop.f32.mrb[0].mxu0
        %v607 = vadd.f32 %v290, %v606
        %v608 = vpop.f32.mrb[0].mxu0
        %v609 = vpop.f32.mrb[0].mxu0
        %v610 = vadd.f32 %v290, %v609
        %v611 = vpop.f32.mrb[0].mxu0
        %612 = vmatprep.mubr.bf16.mxu0 %v397
        %613 = vmatmul.mubr.bf16.gmra.mrb[0].mxu0 %v396
        %v614 = vpop.f32.mrb[0].mxu0
        %v615 = vadd.f32 %v290, %v614
        %v616 = vpop.f32.mrb[0].mxu0
        %v617 = vpop.f32.mrb[0].mxu0
        %v618 = vadd.f32 %v290, %v617
        %v619 = vpop.f32.mrb[0].mxu0
        %620 = vmatprep.mubr.bf16.mxu0 %v399
        %621 = vmatmul.mubr.bf16.gmra.mrb[0].mxu0 %v398
        %v622 = vpop.f32.mrb[0].mxu0
        %v623 = vadd.f32 %v290, %v622
        %v624 = vpop.f32.mrb[0].mxu0
        %v625 = vpop.f32.mrb[0].mxu0
        %v626 = vadd.f32 %v290, %v625
        %v627 = vpop.f32.mrb[0].mxu0
        %628 = vmatprep.mubr.bf16.mxu0 %v401
        %629 = vmatmul.mubr.bf16.gmra.mrb[0].mxu0 %v400
        %v630 = vpop.f32.mrb[0].mxu0
        %v631 = vadd.f32 %v290, %v630
        %v632 = vpop.f32.mrb[0].mxu0
        %v633 = vpop.f32.mrb[0].mxu0
        %v634 = vadd.f32 %v290, %v633
        %v635 = vpop.f32.mrb[0].mxu0
        %636 = vmatprep.mubr.bf16.mxu0 %v403
        %637 = vmatmul.mubr.bf16.gmra.mrb[0].mxu0 %v402
        %v638 = vpop.f32.mrb[0].mxu0
        %v639 = vadd.f32 %v290, %v638
        %v640 = vpop.f32.mrb[0].mxu0
        %v641 = vpop.f32.mrb[0].mxu0
        %v642 = vadd.f32 %v290, %v641
        %v643 = vpop.f32.mrb[0].mxu0
        %644 = vmatprep.mubr.bf16.mxu0 %v405
        %645 = vmatmul.mubr.bf16.gmra.mrb[0].mxu0 %v404
        %v646 = vpop.f32.mrb[0].mxu0
        %v647 = vadd.f32 %v290, %v646
        %v648 = vpop.f32.mrb[0].mxu0
        %v649 = vpop.f32.mrb[0].mxu0
        %v650 = vadd.f32 %v290, %v649
        %v651 = vpop.f32.mrb[0].mxu0
        %652 = vmatprep.mubr.bf16.mxu0 %v407
        %653 = vmatmul.mubr.bf16.gmra.mrb[0].mxu0 %v406
        %v654 = vpop.f32.mrb[0].mxu0
        %v655 = vadd.f32 %v290, %v654
        %v656 = vpop.f32.mrb[0].mxu0
        %v657 = vpop.f32.mrb[0].mxu0
        %v658 = vadd.f32 %v290, %v657
        %v659 = vpop.f32.mrb[0].mxu0
        %660 = vmatprep.mubr.bf16.mxu0 %v409
        %661 = vmatmul.mubr.bf16.gmra.mrb[0].mxu0 %v408
        %v662 = vpop.f32.mrb[0].mxu0
        %v663 = vadd.f32 %v290, %v662
        %v664 = vpop.f32.mrb[0].mxu0
        %v665 = vpop.f32.mrb[0].mxu0
        %v666 = vadd.f32 %v290, %v665
        %v667 = vpop.f32.mrb[0].mxu0
        %668 = vmatprep.mubr.bf16.mxu0 %v411
        %669 = vmatmul.mubr.bf16.gmra.mrb[0].mxu0 %v410
        %v670 = vpop.f32.mrb[0].mxu0
        %v671 = vadd.f32 %v290, %v670
        %v672 = vpop.f32.mrb[0].mxu0
        %v673 = vpop.f32.mrb[0].mxu0
        %v674 = vadd.f32 %v290, %v673
        %v675 = vpop.f32.mrb[0].mxu0
        %676 = vmatprep.mubr.bf16.mxu0 %v413
        %677 = vmatmul.mubr.bf16.gmra.mrb[0].mxu0 %v412
        %v678 = vpop.f32.mrb[0].mxu0
        %v679 = vadd.f32 %v290, %v678
        %v680 = vpop.f32.mrb[0].mxu0
        %v681 = vpop.f32.mrb[0].mxu0
        %v682 = vadd.f32 %v290, %v681
        %v683 = vpop.f32.mrb[0].mxu0
        %684 = vmatprep.mubr.bf16.mxu0 %v415
        %685 = vmatmul.mubr.bf16.gmra.mrb[0].mxu0 %v414
        %v686 = vpop.f32.mrb[0].mxu0
        %v687 = vadd.f32 %v290, %v686
        %v688 = vpop.f32.mrb[0].mxu0
        %v689 = vpop.f32.mrb[0].mxu0
        %v690 = vadd.f32 %v290, %v689
        %v691 = vpop.f32.mrb[0].mxu0
        %692 = vmatprep.mubr.bf16.mxu0 %v417
        %693 = vmatmul.mubr.bf16.gmra.mrb[0].mxu0 %v416
        %v694 = vpop.f32.mrb[0].mxu0
        %v695 = vadd.f32 %v290, %v694
        %v696 = vpop.f32.mrb[0].mxu0
        %v697 = vpop.f32.mrb[0].mxu0
        %v698 = vadd.f32 %v290, %v697
        %v699 = vpop.f32.mrb[0].mxu0
        %700 = vmatprep.mubr.bf16.mxu0 %v419
        %701 = vmatmul.mubr.bf16.gmra.mrb[0].mxu0 %v418
        %v702 = vpop.f32.mrb[0].mxu0
        %v703 = vadd.f32 %v290, %v702
        %v704 = vpop.f32.mrb[0].mxu0
        %v705 = vpop.f32.mrb[0].mxu0
        %v706 = vadd.f32 %v290, %v705
        %v707 = vpop.f32.mrb[0].mxu0
        %708 = vdwg.mxu0
        %v709 = vmax.f32 %v583, 0.0
        %v710 = vmax.f32 %v586, 0.0
        %v711 = vmax.f32 %v591, 0.0
        %v712 = vmax.f32 %v594, 0.0
        %v713 = vmax.f32 %v599, 0.0
        %v714 = vmax.f32 %v602, 0.0
        %v715 = vmax.f32 %v607, 0.0
        %v716 = vmax.f32 %v610, 0.0
        %v717 = vmax.f32 %v615, 0.0
        %v718 = vmax.f32 %v618, 0.0
        %v719 = vmax.f32 %v623, 0.0
        %v720 = vmax.f32 %v626, 0.0
        %v721 = vmax.f32 %v631, 0.0
        %v722 = vmax.f32 %v634, 0.0
        %v723 = vmax.f32 %v639, 0.0
        %v724 = vmax.f32 %v642, 0.0
        %v725 = vmax.f32 %v647, 0.0
        %v726 = vmax.f32 %v650, 0.0
        %v727 = vmax.f32 %v655, 0.0
        %v728 = vmax.f32 %v658, 0.0
        %v729 = vmax.f32 %v663, 0.0
        %v730 = vmax.f32 %v666, 0.0
        %v731 = vmax.f32 %v671, 0.0
        %v732 = vmax.f32 %v674, 0.0
        %v733 = vmax.f32 %v679, 0.0
        %v734 = vmax.f32 %v682, 0.0
        %v735 = vmax.f32 %v687, 0.0
        %v736 = vmax.f32 %v690, 0.0
        %v737 = vmax.f32 %v695, 0.0
        %v738 = vmax.f32 %v698, 0.0
        %v739 = vmax.f32 %v703, 0.0
        %v740 = vmax.f32 %v706, 0.0
        %v741 = vpack.c.bf16 %v710, %v709
        %v742 = vpack.c.bf16 %v712, %v711
        %v743 = vpack.c.bf16 %v714, %v713
        %v744 = vpack.c.bf16 %v716, %v715
        %v745 = vpack.c.bf16 %v718, %v717
        %v746 = vpack.c.bf16 %v720, %v719
        %v747 = vpack.c.bf16 %v722, %v721
        %v748 = vpack.c.bf16 %v724, %v723
        %v749 = vpack.c.bf16 %v726, %v725
        %v750 = vpack.c.bf16 %v728, %v727
        %v751 = vpack.c.bf16 %v730, %v729
        %v752 = vpack.c.bf16 %v732, %v731
        %v753 = vpack.c.bf16 %v734, %v733
        %v754 = vpack.c.bf16 %v736, %v735
        %v755 = vpack.c.bf16 %v738, %v737
        %v756 = vpack.c.bf16 %v740, %v739
        %v773 = vunpack.c.l.b16 %v741
        %v774 = vunpack.c.h.b16 %v741
        %v775 = vunpack.c.l.b16 %v742
        %v776 = vunpack.c.h.b16 %v742
        %v777 = vunpack.c.l.b16 %v743
        %v778 = vunpack.c.h.b16 %v743
        %v779 = vunpack.c.l.b16 %v744
        %v780 = vunpack.c.h.b16 %v744
        %v781 = vunpack.c.l.b16 %v745
        %v782 = vunpack.c.h.b16 %v745
        %v783 = vunpack.c.l.b16 %v746
        %v784 = vunpack.c.h.b16 %v746
        %v785 = vunpack.c.l.b16 %v747
        %v786 = vunpack.c.h.b16 %v747
        %v787 = vunpack.c.l.b16 %v748
        %v788 = vunpack.c.h.b16 %v748
        %v789 = vunpack.c.l.b16 %v749
        %v790 = vunpack.c.h.b16 %v749
        %v791 = vunpack.c.l.b16 %v750
        %v792 = vunpack.c.h.b16 %v750
        %v793 = vunpack.c.l.b16 %v751
        %v794 = vunpack.c.h.b16 %v751
        %v795 = vunpack.c.l.b16 %v752
        %v796 = vunpack.c.h.b16 %v752
        %v797 = vunpack.c.l.b16 %v753
        %v798 = vunpack.c.h.b16 %v753
        %v799 = vunpack.c.l.b16 %v754
        %v800 = vunpack.c.h.b16 %v754
        %v801 = vunpack.c.l.b16 %v755
        %v802 = vunpack.c.h.b16 %v755
        %v803 = vunpack.c.l.b16 %v756
        %v804 = vunpack.c.h.b16 %v756
        %v805 = vpack.c.b16 %v773, %v773
        %v806 = vpack.c.b16 %v774, %v774
        %v807 = vpack.c.b16 %v775, %v775
        %v808 = vpack.c.b16 %v776, %v776
        %v809 = vpack.c.b16 %v777, %v777
        %v810 = vpack.c.b16 %v778, %v778
        %v811 = vpack.c.b16 %v779, %v779
        %v812 = vpack.c.b16 %v780, %v780
        %v813 = vpack.c.b16 %v781, %v781
        %v814 = vpack.c.b16 %v782, %v782
        %v815 = vpack.c.b16 %v783, %v783
        %v816 = vpack.c.b16 %v784, %v784
        %v817 = vpack.c.b16 %v785, %v785
        %v818 = vpack.c.b16 %v786, %v786
        %v819 = vpack.c.b16 %v787, %v787
        %v820 = vpack.c.b16 %v788, %v788
        %v821 = vpack.c.b16 %v789, %v789
        %v822 = vpack.c.b16 %v790, %v790
        %v823 = vpack.c.b16 %v791, %v791
        %v824 = vpack.c.b16 %v792, %v792
        %v825 = vpack.c.b16 %v793, %v793
        %v826 = vpack.c.b16 %v794, %v794
        %v827 = vpack.c.b16 %v795, %v795
        %v828 = vpack.c.b16 %v796, %v796
        %v829 = vpack.c.b16 %v797, %v797
        %v830 = vpack.c.b16 %v798, %v798
        %v831 = vpack.c.b16 %v799, %v799
        %v832 = vpack.c.b16 %v800, %v800
        %v833 = vpack.c.b16 %v801, %v801
        %v834 = vpack.c.b16 %v802, %v802
        %v835 = vpack.c.b16 %v803, %v803
        %v836 = vpack.c.b16 %v804, %v804
        %vm869 = vcmask 519168
        %870 = vst.msk [vmem:[%s204] sm:$0xf] %vm869, %v805
        %871 = vst.msk [vmem:[%s204 + $0x4] sm:$0xf] %vm869, %v806
        %872 = vst.msk [vmem:[%s204 + $0x8] sm:$0xf] %vm869, %v807
        %873 = vst.msk [vmem:[%s204 + $0xc] sm:$0xf] %vm869, %v808
        %874 = vst.msk [vmem:[%s204 + $0x10] sm:$0xf] %vm869, %v809
        %875 = vst.msk [vmem:[%s204 + $0x14] sm:$0xf] %vm869, %v810
        %876 = vst.msk [vmem:[%s204 + $0x18] sm:$0xf] %vm869, %v811
        %877 = vst.msk [vmem:[%s204 + $0x1c] sm:$0xf] %vm869, %v812
        %878 = vst.msk [vmem:[%s204 + $0x20] sm:$0xf] %vm869, %v813
        %879 = vst.msk [vmem:[%s204 + $0x24] sm:$0xf] %vm869, %v814
        %880 = vst.msk [vmem:[%s204 + $0x28] sm:$0xf] %vm869, %v815
        %881 = vst.msk [vmem:[%s204 + $0x2c] sm:$0xf] %vm869, %v816
        %882 = vst.msk [vmem:[%s204 + $0x30] sm:$0xf] %vm869, %v817
        %883 = vst.msk [vmem:[%s204 + $0x34] sm:$0xf] %vm869, %v818
        %884 = vst.msk [vmem:[%s204 + $0x38] sm:$0xf] %vm869, %v819
        %885 = vst.msk [vmem:[%s204 + $0x3c] sm:$0xf] %vm869, %v820
        %886 = vst.msk [vmem:[%s204 + $0x40] sm:$0xf] %vm869, %v821
        %887 = vst.msk [vmem:[%s204 + $0x44] sm:$0xf] %vm869, %v822
        %888 = vst.msk [vmem:[%s204 + $0x48] sm:$0xf] %vm869, %v823
        %889 = vst.msk [vmem:[%s204 + $0x4c] sm:$0xf] %vm869, %v824
        %890 = vst.msk [vmem:[%s204 + $0x50] sm:$0xf] %vm869, %v825
        %891 = vst.msk [vmem:[%s204 + $0x54] sm:$0xf] %vm869, %v826
        %892 = vst.msk [vmem:[%s204 + $0x58] sm:$0xf] %vm869, %v827
        %893 = vst.msk [vmem:[%s204 + $0x5c] sm:$0xf] %vm869, %v828
        %894 = vst.msk [vmem:[%s204 + $0x60] sm:$0xf] %vm869, %v829
        %895 = vst.msk [vmem:[%s204 + $0x64] sm:$0xf] %vm869, %v830
        %896 = vst.msk [vmem:[%s204 + $0x68] sm:$0xf] %vm869, %v831
        %897 = vst.msk [vmem:[%s204 + $0x6c] sm:$0xf] %vm869, %v832
        %898 = vst.msk [vmem:[%s204 + $0x70] sm:$0xf] %vm869, %v833
        %899 = vst.msk [vmem:[%s204 + $0x74] sm:$0xf] %vm869, %v834
        %900 = vst.msk [vmem:[%s204 + $0x78] sm:$0xf] %vm869, %v835
        %901 = vst.msk [vmem:[%s204 + $0x7c] sm:$0xf] %vm869, %v836
        %s902 = sand.u32 %s117, 1
        %s903 = scalar_lea.sflag [#allocation3], %s902
        %s904 = sand.u32 %s117, 1
        %s905 = smul.addr %s904, 128
        %s906 = scalar_lea.vmem [#allocation2], %s905
        // Predicated region
        $region33: #{_conv_bn_impl.1} parent=31 // pred_check
          %p907 = pneg %p127
        $region34: #{_conv_bn_impl.1} parent=31 // pred_check_branch
          %909 = sbr.rel (%p907) target = $region36
        $region35: #{_conv_bn_impl.1} parent=31 // pred_region
          %s910 = smul.u32 32, %s22
          %s912 = ssub.s32 2048, 2048
          %913 = vsyncadd %s903, %s912
          %s914 = sadd.s32 %s21, %s910
          %s915 = smul.addr %s914, 64
          %s916 = scalar_lea.hbm %s3, %s915
          %s917 = sshll.u32 %s906, 4
          %s918 = int_to_ptr.vmem [resolvable:$true] %s917
          %923 = dma.vmem_to_hbm [thread:$0]  %s918, 2048, %s916, %s903, 64, 64, 4
        $region36: #{_conv_bn_impl.1} parent=31 // pred_fallthru
          _
      $region32: #{_conv_bn_impl.1} parent=5 // pred_fallthru
        _
      %p924 = scmp.le.s32.totalorder 2, %s12
      // Predicated region
      $region37: #{_conv_bn_impl.1} parent=5 // pred_check
        %p925 = pneg %p924
      $region38: #{_conv_bn_impl.1} parent=5 // pred_check_branch
        %927 = sbr.rel (%p925) target = $region40
      $region39: #{_conv_bn_impl.1} parent=5 // pred_region
        %s928 = ssub.s32 %s12, 2
        // Predicated region
        $region41: #{_conv_bn_impl.1} parent=39 // pred_check
          %p929 = pneg %p133
        $region42: #{_conv_bn_impl.1} parent=39 // pred_check_branch
          %931 = sbr.rel (%p929) target = $region44
        $region43: #{_conv_bn_impl.1} parent=39 // pred_region
          %s932 = sand.u32 %s118, 1
          %s933 = scalar_lea.sflag [#allocation3], %s932
          %s934 = sand.u32 %s118, 1
          %s935 = smul.addr %s934, 128
          %s936 = scalar_lea.vmem [#allocation2], %s935
          %937 = dma.done %s933, 2048
        $region44: #{_conv_bn_impl.1} parent=39 // pred_fallthru
          _
      $region40: #{_conv_bn_impl.1} parent=5 // pred_fallthru
        _
    $region6: #{_conv_bn_impl.1} parent=1 // loop_footer
      %s16 = sadd.s32 1, %s12
    $region7: #{_conv_bn_impl.1} parent=1 // loop_footer_branch
      %11 = sbr.rel target = $region3
    $region8: #{_conv_bn_impl.1} parent=1 // loop_exit
      _
    %938 = vsyncpa [#allocation3], 1
    %s939 = scalar_lea.sflag [#allocation3], 1
    %940 = vsyncpa %s939, 1

</llo_original>
